<compile_context>
chip_gen: v7x
topology: tpu7x:2x2x1
jax: 0.10.0
libtpu: 0.0.40
codegen_flags: <defaults>
</compile_context>

<pallas_src>
import functools

import jax
import jax.numpy as jnp
from jax.experimental import pallas as pl
from jax.experimental.pallas import tpu as pltpu

_BN_EPS = 1e-5


# ------------------------------- kernels ----------------------------------- #

def _linear_kernel(x_ref, wt_ref, bias_ref, o_ref, *, tn):
    # x_ref: (TM, F), wt_ref: (F, TN), bias_ref: (1, BDIM) resident, o_ref: (TM, TN)
    y = jnp.dot(x_ref[...], wt_ref[...], preferred_element_type=jnp.float32)
    if bias_ref.shape[1] == tn:          # single column tile: whole vector
        b = bias_ref[...]
    else:
        col = pl.multiple_of(pl.program_id(1) * tn, tn)
        b = bias_ref[:, pl.ds(col, tn)]
    o_ref[...] = (y + b).astype(o_ref.dtype)


def _linear_bn_kernel(x_ref, wt_ref, gamma_ref, beta_ref, o_ref, *, eps):
    # Full-batch BN (exact batch statistics).  Linear bias intentionally omitted
    # (mean subtraction cancels it exactly).  Epilogue folded into scale/shift.
    # x_ref: (N, F), wt_ref: (F, TN), gamma/beta: (1, TN), o_ref: (N, TN)
    y = jnp.dot(x_ref[...], wt_ref[...], preferred_element_type=jnp.float32)
    mean = jnp.mean(y, axis=0, keepdims=True)
    centered = y - mean
    var = jnp.mean(centered * centered, axis=0, keepdims=True)
    scale = gamma_ref[...] * jax.lax.rsqrt(var + eps)      # EUP rsqrt, (1, TN)
    o_ref[...] = (centered * scale + beta_ref[...]).astype(o_ref.dtype)


def _linear_stats_kernel(x_ref, wt_ref, y_ref, sum_ref, sq_ref):
    # Streaming BN, pass 1: y = x @ W^T written to HBM (f32) plus per-column
    # sum / sum-of-squares accumulated across the (inner, "arbitrary") batch axis.
    i = pl.program_id(1)

    @pl.when(i == 0)
    def _():
        sum_ref[...] = jnp.zeros_like(sum_ref)
        sq_ref[...] = jnp.zeros_like(sq_ref)

    y = jnp.dot(x_ref[...], wt_ref[...], preferred_element_type=jnp.float32)
    y_ref[...] = y
    sum_ref[...] += jnp.sum(y, axis=0, keepdims=True)
    sq_ref[...] += jnp.sum(y * y, axis=0, keepdims=True)


def _affine_kernel(y_ref, scale_ref, shift_ref, o_ref, *, tn):
    # Streaming BN, pass 2: o = y*scale + shift.  scale/shift are resident
    # (1, BDIM) blocks (constant index map); slice the column range in-kernel.
    if scale_ref.shape[1] == tn:
        scale = scale_ref[...]
        shift = shift_ref[...]
    else:
        col = pl.multiple_of(pl.program_id(1) * tn, tn)
        scale = scale_ref[:, pl.ds(col, tn)]
        shift = shift_ref[:, pl.ds(col, tn)]
    o_ref[...] = (y_ref[...] * scale + shift).astype(o_ref.dtype)


# --------------------------- tiling / VMEM budget --------------------------- #

def _vmem_budget_bytes():
    """~75% of per-core VMEM, capped at 48 MiB so it is safe on v7x (64 MiB/TC)
    even if get_tpu_info reports per-chip capacity."""
    cap = 64 << 20
    try:
        info = pltpu.get_tpu_info()
        cap = int(getattr(info, "vmem_capacity_bytes", cap)) or cap
    except Exception:
        pass
    return max(16 << 20, min((cap * 3) // 4, 48 << 20))


def _lane_tiles(dim):
    """Candidate tiles for the last (lane) dim: full dim, or multiples of 128."""
    cands = {dim}
    for t in (2048, 1024, 512, 256, 128):
        if t < dim and dim % t == 0:
            cands.add(t)
    return sorted(cands, reverse=True)


def _sublane_tiles(dim):
    """Candidate tiles for the 2nd-to-last dim: full dim, or multiples of 8."""
    cands = {dim}
    for t in (2048, 1024, 512, 256, 128, 64, 32, 16, 8):
        if t < dim and dim % t == 0:
            cands.add(t)
    return sorted(cands, reverse=True)


def _select_tiles(n, f, bdim, x_isize, w_isize, o_isize, budget, row_tiles=None):
    """Largest (tn, tm) whose double-buffered footprint fits the budget.
    tm steps down before tn (keep W^T tile / output lane-width large)."""
    tns = _lane_tiles(bdim)
    tms = _sublane_tiles(n) if row_tiles is None else list(row_tiles)

    def footprint(tm, tn):
        est = 2 * (tm * f * x_isize + f * tn * w_isize + tm * tn * o_isize)
        est += tm * tn * 4            # f32 matmul result before cast/epilogue
        est += 4 * bdim * 4           # resident (1, bdim) param vectors
        return est + (2 << 20)        # compiler internal scratch headroom

    for tn in tns:
        for tm in tms:
            if footprint(tm, tn) <= budget:
                return tm, tn
    return tms[-1], tns[-1]           # smallest available (may still be large N)


def _bn_fullbatch_tn(n, f, bdim, x_isize, w_isize, o_isize, budget):
    """Largest tn for which the full-batch BN block fits; None -> stream."""
    for tn in _lane_tiles(bdim):
        est = 2 * n * f * x_isize                       # full-batch x (2 bufs worst case)
        est += 2 * (f * tn * w_isize + n * tn * o_isize + 2 * tn * 4)
        est += n * tn * 4                               # f32 y intermediate
        est += 2 << 20
        if est <= budget:
            return tn
    return None


# ------------------------------ forward paths ------------------------------- #

def _forward_ori(x, w_t, bias, out_dtype, budget):
    n, f = x.shape
    bdim = w_t.shape[1]
    tm, tn = _select_tiles(n, f, bdim, x.dtype.itemsize, w_t.dtype.itemsize,
                           out_dtype.itemsize, budget)
    bias2 = bias.reshape(1, bdim).astype(jnp.float32)

    return pl.pallas_call(
        functools.partial(_linear_kernel, tn=tn),
        out_shape=jax.ShapeDtypeStruct((n, bdim), out_dtype),
        grid_spec=pltpu.PrefetchScalarGridSpec(
            num_scalar_prefetch=0,
            grid=(n // tm, bdim // tn),
            in_specs=[
                pl.BlockSpec((tm, f), lambda i, j: (i, 0)),      # x row tile
                pl.BlockSpec((f, tn), lambda i, j: (0, j)),      # W^T column tile
                pl.BlockSpec((1, bdim), lambda i, j: (0, 0)),    # resident bias
            ],
            out_specs=pl.BlockSpec((tm, tn), lambda i, j: (i, j)),
        ),
        compiler_params=pltpu.CompilerParams(
            dimension_semantics=("parallel", "parallel"),
            vmem_limit_bytes=budget),
    )(x, w_t, bias2)


def _forward_bn_fullbatch(x, w_t, gamma, beta, out_dtype, eps, budget, tn):
    n, f = x.shape
    bdim = w_t.shape[1]
    gamma2 = gamma.reshape(1, bdim).astype(jnp.float32)
    beta2 = beta.reshape(1, bdim).astype(jnp.float32)

    return pl.pallas_call(
        functools.partial(_linear_bn_kernel, eps=eps),
        out_shape=jax.ShapeDtypeStruct((n, bdim), out_dtype),
        grid_spec=pltpu.PrefetchScalarGridSpec(
            num_scalar_prefetch=0,
            grid=(bdim // tn,),
            in_specs=[
                pl.BlockSpec((n, f), lambda j: (0, 0)),          # full batch x
                pl.BlockSpec((f, tn), lambda j: (0, j)),         # W^T column tile
                pl.BlockSpec((1, tn), lambda j: (0, j)),         # gamma tile
                pl.BlockSpec((1, tn), lambda j: (0, j)),         # beta tile
            ],
            out_specs=pl.BlockSpec((n, tn), lambda j: (0, j)),
        ),
        compiler_params=pltpu.CompilerParams(
            dimension_semantics=("parallel",),
            vmem_limit_bytes=budget),
    )(x, w_t, gamma2, beta2)


def _forward_bn_streaming(x, w_t, gamma, beta, out_dtype, eps, budget, row_tile):
    n, f = x.shape
    bdim = w_t.shape[1]
    row_tiles = None
    if row_tile is not None:
        assert n % row_tile == 0 and (row_tile % 8 == 0 or row_tile == n), \
            "bn_row_tile must divide N and be a multiple of 8 (or equal N)"
        row_tiles = [row_tile]
    tm, tn = _select_tiles(n, f, bdim, x.dtype.itemsize, w_t.dtype.itemsize,
                           4, budget, row_tiles=row_tiles)   # f32 intermediate y

    # Pass 1: linear + per-column sum / sum-of-squares (f32 accumulators kept
    # resident across the inner "arbitrary" batch axis via the output BlockSpec).
    y, s, sq = pl.pallas_call(
        _linear_stats_kernel,
        out_shape=(jax.ShapeDtypeStruct((n, bdim), jnp.float32),
                   jax.ShapeDtypeStruct((1, bdim), jnp.float32),
                   jax.ShapeDtypeStruct((1, bdim), jnp.float32)),
        grid_spec=pltpu.PrefetchScalarGridSpec(
            num_scalar_prefetch=0,
            grid=(bdim // tn, n // tm),
            in_specs=[
                pl.BlockSpec((tm, f), lambda j, i: (i, 0)),      # x batch tile
                pl.BlockSpec((f, tn), lambda j, i: (0, j)),      # W^T column tile
            ],
            out_specs=[
                pl.BlockSpec((tm, tn), lambda j, i: (i, j)),     # y
                pl.BlockSpec((1, tn), lambda j, i: (0, j)),      # sum (resident)
                pl.BlockSpec((1, tn), lambda j, i: (0, j)),      # sumsq (resident)
            ],
        ),
        compiler_params=pltpu.CompilerParams(
            dimension_semantics=("parallel", "arbitrary"),
            vmem_limit_bytes=budget),
    )(x, w_t)

    # Tiny (1, bdim) vectors: fold BN into one scale/shift (plain XLA, negligible).
    inv_n = 1.0 / n
    mean = s * inv_n
    var = jnp.maximum(sq * inv_n - mean * mean, 0.0)     # biased variance
    scale = gamma.reshape(1, bdim).astype(jnp.float32) * jax.lax.rsqrt(var + eps)
    shift = beta.reshape(1, bdim).astype(jnp.float32) - mean * scale

    # Pass 2: elementwise affine, lane-dense tiles; scale/shift resident.
    return pl.pallas_call(
        functools.partial(_affine_kernel, tn=tn),
        out_shape=jax.ShapeDtypeStruct((n, bdim), out_dtype),
        grid_spec=pltpu.PrefetchScalarGridSpec(
            num_scalar_prefetch=0,
            grid=(n // tm, bdim // tn),
            in_specs=[
                pl.BlockSpec((tm, tn), lambda i, j: (i, j)),
                pl.BlockSpec((1, bdim), lambda i, j: (0, 0)),
                pl.BlockSpec((1, bdim), lambda i, j: (0, 0)),
            ],
            out_specs=pl.BlockSpec((tm, tn), lambda i, j: (i, j)),
        ),
        compiler_params=pltpu.CompilerParams(
            dimension_semantics=("parallel", "parallel"),
            vmem_limit_bytes=budget),
    )(y, scale, shift)


def feat_bottleneck_forward(x, weight_t, bias=None, gamma=None, beta=None, *,
                            bottleneck_type="ori", eps=_BN_EPS,
                            matmul_dtype=None, out_dtype=None,
                            bn_streaming=None, bn_row_tile=None):
    """Pallas implementation of feat_bottleneck.forward.

    x:        (N, feature_dim)
    weight_t: (feature_dim, bottleneck_dim)  -- PyTorch weight pre-transposed
              ONCE outside the hot path (and ideally pre-cast to matmul_dtype).
    bias:     (bottleneck_dim,)              -- used only when type != 'bn'
    gamma, beta: (bottleneck_dim,)           -- used only when type == 'bn'
    matmul_dtype: optional MXU operand dtype (jnp.bfloat16 recommended on TPU);
                  the cast happens OUTSIDE the kernel, accumulation stays f32.
    out_dtype:    optional output dtype (bf16 halves writeback if allowed).
    bn_streaming: None=auto (by VMEM budget), True/False force streaming/full-batch.
    bn_row_tile:  optional batch tile override for the streaming BN path.
    """
    n, f = x.shape
    assert weight_t.shape[0] == f, "weight_t must be (feature_dim, bottleneck_dim)"
    bdim = weight_t.shape[1]
    out_dtype = jnp.dtype(x.dtype if out_dtype is None else out_dtype)

    if matmul_dtype is not None:
        matmul_dtype = jnp.dtype(matmul_dtype)
        # Pre-cast outside the kernel (no-op if already cast at param prep):
        # halves operand HBM traffic and removes per-tile VPU casts.
        x = x.astype(matmul_dtype)
        weight_t = weight_t.astype(matmul_dtype)

    budget = _vmem_budget_bytes()

    if bottleneck_type == "bn":
        assert gamma is not None and beta is not None
        if bn_streaming is True:
            return _forward_bn_streaming(x, weight_t, gamma, beta, out_dtype,
                                         eps, budget, bn_row_tile)
        tn_full = _bn_fullbatch_tn(n, f, bdim, x.dtype.itemsize,
                                   weight_t.dtype.itemsize,
                                   out_dtype.itemsize, budget)
        if bn_streaming is False:
            return _forward_bn_fullbatch(x, weight_t, gamma, beta, out_dtype,
                                         eps, budget,
                                         tn_full if tn_full is not None
                                         else _lane_tiles(bdim)[0])
        if tn_full is None:            # auto: too big for one VMEM block -> stream
            return _forward_bn_streaming(x, weight_t, gamma, beta, out_dtype,
                                         eps, budget, bn_row_tile)
        return _forward_bn_fullbatch(x, weight_t, gamma, beta, out_dtype,
                                     eps, budget, tn_full)

    assert bias is not None
    return _forward_ori(x, weight_t, bias, out_dtype, budget)


# -------------------------------- reference --------------------------------- #

def _reference(x, weight, bias, gamma, beta, bottleneck_type,
               eps=_BN_EPS, matmul_dtype=None):
    xa, wa = x, weight.T
    if matmul_dtype is not None:
        xa = xa.astype(matmul_dtype)
        wa = wa.astype(matmul_dtype)
    y = jnp.dot(xa, wa, preferred_element_type=jnp.float32) + bias
    if bottleneck_type == "bn":
        mean = y.mean(axis=0, keepdims=True)
        var = ((y - mean) ** 2).mean(axis=0, keepdims=True)
        y = (y - mean) / jnp.sqrt(var + eps) * gamma + beta
    return y


if __name__ == "__main__":
    key = jax.random.PRNGKey(0)
    k_x, k_w, k_b, k_g, k_be, k_x2 = jax.random.split(key, 6)

    N, FEATURE_DIM, BOTTLENECK_DIM = 8, 32, 256

    x = jax.random.normal(k_x, (N, FEATURE_DIM), dtype=jnp.float32)

    # nn.Linear default init: U(-1/sqrt(fan_in), 1/sqrt(fan_in))
    bound = 1.0 / (FEATURE_DIM ** 0.5)
    weight = jax.random.uniform(k_w, (BOTTLENECK_DIM, FEATURE_DIM),
                                minval=-bound, maxval=bound, dtype=jnp.float32)
    bias = jax.random.uniform(k_b, (BOTTLENECK_DIM,),
                              minval=-bound, maxval=bound, dtype=jnp.float32)
    # Non-trivial affine params to exercise the folded scale/shift epilogue.
    gamma = 1.0 + 0.1 * jax.random.normal(k_g, (BOTTLENECK_DIM,), dtype=jnp.float32)
    beta = 0.1 * jax.random.normal(k_be, (BOTTLENECK_DIM,), dtype=jnp.float32)

    # One-time parameter prep (outside the per-call hot path).
    w_t = jnp.asarray(weight.T)                 # (FEATURE_DIM, BOTTLENECK_DIM)
    w_t_bf16 = w_t.astype(jnp.bfloat16)         # pre-cast ONCE for the bf16 path

    # 1) f32 paths, both modes (auto tile / path selection).
    for btype in ("ori", "bn"):
        out = feat_bottleneck_forward(x, w_t, bias, gamma, beta,
                                      bottleneck_type=btype)
        out = jax.block_until_ready(out)
        ref = _reference(x, weight, bias, gamma, beta, btype)
        assert out.shape == (N, BOTTLENECK_DIM)
        assert jnp.allclose(out, ref, atol=1e-4, rtol=1e-4), f"mismatch ({btype})"

    # 2) Streaming two-pass BN (forced; exercises the batch-tiled accumulator).
    x2 = jax.random.normal(k_x2, (64, FEATURE_DIM), dtype=jnp.float32)
    out_s = feat_bottleneck_forward(x2, w_t, bias, gamma, beta,
                                    bottleneck_type="bn",
                                    bn_streaming=True, bn_row_tile=16)
    out_s = jax.block_until_ready(out_s)
    ref_s = _reference(x2, weight, bias, gamma, beta, "bn")
    assert out_s.shape == (64, BOTTLENECK_DIM)
    assert jnp.allclose(out_s, ref_s, atol=1e-4, rtol=1e-4), "mismatch (bn/streaming)"

    # 3) bf16 MXU operands (pre-cast outside the kernel), f32 accum + f32 BN math.
    out_bf = feat_bottleneck_forward(x, w_t_bf16, bias, gamma, beta,
                                     bottleneck_type="bn",
                                     matmul_dtype=jnp.bfloat16)
    out_bf = jax.block_until_ready(out_bf)
    ref_bf = _reference(x, weight, bias, gamma, beta, "bn",
                        matmul_dtype=jnp.bfloat16)
    assert jnp.allclose(out_bf, ref_bf, atol=5e-2, rtol=5e-2), "mismatch (bn/bf16)"

    print("KERNEL_OK")
</pallas_src>

<mosaic_0001>
module attributes {stable_mosaic.version = 11 : i64} {
  func.func @_linear_kernel(%arg0: i32, %arg1: i32, %arg2: memref<8x32xf32, #tpu.memory_space<vmem>>, %arg3: memref<32x256xf32, #tpu.memory_space<vmem>>, %arg4: memref<1x256xf32, #tpu.memory_space<vmem>>, %arg5: memref<8x256xf32, #tpu.memory_space<vmem>>) attributes {dimension_semantics = [#tpu.dimension_semantics<parallel>, #tpu.dimension_semantics<parallel>], iteration_bounds = array<i64: 1, 1>, scalar_prefetch = 0 : i64, scratch_operands = 0 : i64, tpu.core_type = #tpu.core_type<tc>, window_params = [{transform_indices = @transform_0, window_bounds = array<i64: 8, 32>}, {transform_indices = @transform_1, window_bounds = array<i64: 32, 256>}, {pipeline_mode = #tpu.pipeline_mode<synchronous>, transform_indices = @transform_2, window_bounds = array<i64: 1, 256>}, {transform_indices = @transform_3, window_bounds = array<i64: 8, 256>}]} {
    %c0 = arith.constant 0 : index
    %c0_0 = arith.constant 0 : index
    %0 = vector.load %arg2[%c0, %c0_0] : memref<8x32xf32, #tpu.memory_space<vmem>>, vector<8x32xf32>
    %c0_1 = arith.constant 0 : index
    %c0_2 = arith.constant 0 : index
    %1 = vector.load %arg3[%c0_1, %c0_2] : memref<32x256xf32, #tpu.memory_space<vmem>>, vector<32x256xf32>
    %cst = arith.constant dense<0.000000e+00> : vector<8x256xf32>
    %2 = tpu.matmul %0, %1, %cst {dimension_numbers = #tpu.dot_dimension_numbers<[1], [0], [0], [1], [0, 0, 1, 1], [], []>} : vector<8x32xf32>, vector<32x256xf32>, vector<8x256xf32> -> vector<8x256xf32>
    %c0_3 = arith.constant 0 : index
    %c0_4 = arith.constant 0 : index
    %3 = vector.load %arg4[%c0_3, %c0_4] : memref<1x256xf32, #tpu.memory_space<vmem>>, vector<1x256xf32>
    %4 = vector.broadcast %3 : vector<1x256xf32> to vector<8x256xf32>
    %5 = arith.addf %2, %4 : vector<8x256xf32>
    %c0_5 = arith.constant 0 : index
    %c0_6 = arith.constant 0 : index
    %6 = vector.load %arg5[%c0_5, %c0_6] : memref<8x256xf32, #tpu.memory_space<vmem>>, vector<8x256xf32>
    tpu.vector_store %arg5[%c0_5, %c0_6], %5 {strides = array<i32>} : memref<8x256xf32, #tpu.memory_space<vmem>>, vector<8x256xf32>,
    return
  }
  func.func @transform_0(%arg0: i32, %arg1: i32) -> (i32, i32) {
    %c0_i32 = arith.constant 0 : i32
    %c0_i32_0 = arith.constant 0 : i32
    return %arg0, %c0_i32 : i32, i32
  }
  func.func @transform_1(%arg0: i32, %arg1: i32) -> (i32, i32) {
    %c0_i32 = arith.constant 0 : i32
    %c0_i32_0 = arith.constant 0 : i32
    return %c0_i32, %arg1 : i32, i32
  }
  func.func @transform_2(%arg0: i32, %arg1: i32) -> (i32, i32) {
    %c0_i32 = arith.constant 0 : i32
    %c0_i32_0 = arith.constant 0 : i32
    %c0_i32_1 = arith.constant 0 : i32
    return %c0_i32, %c0_i32_0 : i32, i32
  }
  func.func @transform_3(%arg0: i32, %arg1: i32) -> (i32, i32) {
    %c0_i32 = arith.constant 0 : i32
    return %arg0, %arg1 : i32, i32
  }
}

</mosaic_0001>

<llo_original>
// kernel: tpu_custom_call.1
$region0: #{tpu_custom_call.1}
  #allocation0 [shape = 'u32[]', space=smem, size = 0x4, offset = 0x4, fixed_abs, tag = 'smem constant byte address 0x4 - core index']
  #allocation1 [shape = 'u32[144,128]{1,0:T(1,128)}', space=vmem, size = 0x12000, scoped, tag = 'internal scratch']
  %s0 = inlined_call_operand.hbm [shape: f32[8,32], index: 0, kind: input, shape index: {}]
  %s1 = inlined_call_operand.hbm [shape: f32[32,256], index: 1, kind: input, shape index: {}]
  %s2 = inlined_call_operand.vmem [shape: f32[1,256], index: 2, kind: input, shape index: {}]
  %s3 = inlined_call_operand.hbm [shape: f32[8,256], index: 3, kind: output, shape index: {}]
  %s4 = sld [smem:[#allocation0]]
  $region30: #{tpu_custom_call.1} parent=0
    _
  %s6 = ssub.s32 1, %s4
  %s7 = scalar_select 0, %s6, %s4
  $region1: #{tpu_custom_call.1} parent=0
    #allocation2 [shape = 'u8[4096]{0}', space=vmem, size = 0x1000, scoped, tag = 'input window, operand 0, single buffered']
    #allocation3 [shape = 's32[1]{0}', space=sflag, size = 0x4, scoped, tag = 'scoped memory for tpu_custom_call.1']
    #allocation4 [shape = 's32[1]{0}', space=sflag, size = 0x4, scoped, tag = 'scoped memory for tpu_custom_call.1']
    #allocation5 [shape = 'u8[32768]{0}', space=vmem, size = 0x8000, scoped, tag = 'input window, operand 1, single buffered']
    #allocation6 [shape = 's32[1]{0}', space=sflag, size = 0x4, scoped, tag = 'scoped memory for tpu_custom_call.1']
    #allocation7 [shape = 'u8[8192]{0}', space=vmem, size = 0x2000, scoped, tag = 'output window, operand 0, single buffered']
    %8 = vsyncpa [#allocation3], 0
    %9 = vsyncpa [#allocation6], 0
    %10 = vsyncpa [#allocation4], 0
    // Predicated region
    $region2: #{tpu_custom_call.1} parent=1 // pred_check
      _
    $region3: #{tpu_custom_call.1} parent=1 // pred_check_branch
      %12 = sbr.rel (0) target = $region5
    $region4: #{tpu_custom_call.1} parent=1 // pred_region
      %s14 = ssub.s32 128, 128
      %15 = vsyncadd [#allocation3], %s14
      %s17 = sshll.u32 [#allocation2], 4
      %s18 = int_to_ptr.vmem [resolvable:$true] %s17
      %20 = dma.hbm_to_vmem [thread:$0]  %s0, 128, %s18, [#allocation3]
    $region5: #{tpu_custom_call.1} parent=1 // pred_fallthru
      _
    // Predicated region
    $region6: #{tpu_custom_call.1} parent=1 // pred_check
      _
    $region7: #{tpu_custom_call.1} parent=1 // pred_check_branch
      %22 = sbr.rel (0) target = $region9
    $region8: #{tpu_custom_call.1} parent=1 // pred_region
      %s24 = ssub.s32 1024, 1024
      %25 = vsyncadd [#allocation6], %s24
      %s26 = sshll.u32 [#allocation5], 4
      %s27 = int_to_ptr.vmem [resolvable:$true] %s26
      %32 = dma.hbm_to_vmem [thread:$0]  %s1, 1024, %s27, [#allocation6], 256, 256, 16
    $region9: #{tpu_custom_call.1} parent=1 // pred_fallthru
      _
    // Predicated region
    $region10: #{tpu_custom_call.1} parent=1 // pred_check
      _
    $region11: #{tpu_custom_call.1} parent=1 // pred_check_branch
      %34 = sbr.rel (0) target = $region13
    $region12: #{tpu_custom_call.1} parent=1 // pred_region
      _
    $region13: #{tpu_custom_call.1} parent=1 // pred_fallthru
      _
    // Predicated region
    $region14: #{tpu_custom_call.1} parent=1 // pred_check
      _
    $region15: #{tpu_custom_call.1} parent=1 // pred_check_branch
      %36 = sbr.rel (0) target = $region17
    $region16: #{tpu_custom_call.1} parent=1 // pred_region
      %37 = dma.done [#allocation3], 128
    $region17: #{tpu_custom_call.1} parent=1 // pred_fallthru
      _
    // Predicated region
    $region18: #{tpu_custom_call.1} parent=1 // pred_check
      _
    $region19: #{tpu_custom_call.1} parent=1 // pred_check_branch
      %39 = sbr.rel (0) target = $region21
    $region20: #{tpu_custom_call.1} parent=1 // pred_region
      %40 = dma.done [#allocation6], 1024
    $region21: #{tpu_custom_call.1} parent=1 // pred_fallthru
      _
    %v41 = vld [vmem:[#allocation2] sm:$0xff]
    %v42 = vld [vmem:[#allocation5] sm:$0xff]
    %v43 = vld [vmem:[#allocation5 + $0x8] sm:$0xff]
    %v44 = vld [vmem:[#allocation5 + $0x10] sm:$0xff]
    %v45 = vld [vmem:[#allocation5 + $0x18] sm:$0xff]
    %v46 = vld [vmem:[#allocation5 + $0x20] sm:$0xff]
    %v47 = vld [vmem:[#allocation5 + $0x28] sm:$0xff]
    %v48 = vld [vmem:[#allocation5 + $0x30] sm:$0xff]
    %v49 = vld [vmem:[#allocation5 + $0x38] sm:$0xff]
    %v50 = vld [vmem:[%s2] sm:$0x3]
    %v52 = vlaneseq
    %v53 = vshrl.u32 %v52, 7
    %v54 = vsub.s32 0, %v53
    %v55 = vrot.slane %v50, %v54
    %v56 = vlaneseq
    %v57 = vshrl.u32 %v56, 7
    %v58 = vsub.s32 1, %v57
    %v59 = vrot.slane %v50, %v58
    %vm62 = vcmask 261120
    %v64 = vsel %vm62, %v41, 0
    %66 = vmatprep.subr.mxu0 %v43
    %67 = vmatpush1.msra.mxu0 %v42
    %68 = vmatprep.subr.mxu0 %v45
    %69 = vmatpush1.msra.mxu0 %v44
    %70 = vmatprep.subr.mxu0 %v47
    %71 = vmatpush1.msra.mxu0 %v46
    %72 = vmatprep.subr.mxu0 %v49
    %73 = vmatpush1.msra.mxu0 %v48
    %74 = vmatprep.subr.mxu0 0.0
    %75 = vmatpush1.msra.mxu0 0.0
    %76 = vmatprep.subr.mxu0 0.0
    %77 = vmatpush1.msra.mxu0 0.0
    %78 = vmatprep.subr.mxu0 0.0
    %79 = vmatpush1.msra.mxu0 0.0
    %80 = vmatprep.subr.mxu0 0.0
    %81 = vmatpush1.msra.mxu0 0.0
    %82 = vmatprep.subr.mxu0 0.0
    %83 = vmatpush1.msra.mxu0 0.0
    %84 = vmatprep.subr.mxu0 0.0
    %85 = vmatpush1.msra.mxu0 0.0
    %86 = vmatprep.subr.mxu0 0.0
    %87 = vmatpush1.msra.mxu0 0.0
    %88 = vmatprep.subr.mxu0 0.0
    %89 = vmatpush1.msra.mxu0 0.0
    %90 = vmatprep.subr.mxu0 0.0
    %91 = vmatpush1.msra.mxu0 0.0
    %92 = vmatprep.subr.mxu0 0.0
    %93 = vmatpush1.msra.mxu0 0.0
    %94 = vmatprep.subr.mxu0 0.0
    %95 = vmatpush1.msra.mxu0 0.0
    %96 = vmatprep.subr.mxu0 0.0
    %97 = vmatpush1.msra.mxu0 0.0
    %98 = vmatprep.subr.mxu0 0.0
    %99 = vmatpush1.msra.mxu0 0.0
    %100 = vmatprep.subr.mxu0 0.0
    %101 = vmatpush1.msra.mxu0 0.0
    %102 = vmatprep.subr.mxu0 0.0
    %103 = vmatpush1.msra.mxu0 0.0
    %104 = vmatprep.subr.mxu0 0.0
    %105 = vmatpush1.msra.mxu0 0.0
    %106 = vmatprep.subr.mxu0 0.0
    %107 = vmatpush1.msra.mxu0 0.0
    %108 = vmatprep.subr.mxu0 0.0
    %109 = vmatpush1.msra.mxu0 0.0
    %110 = vmatprep.subr.mxu0 0.0
    %111 = vmatpush1.msra.mxu0 0.0
    %112 = vmatprep.subr.mxu0 0.0
    %113 = vmatpush1.msra.mxu0 0.0
    %114 = vmatprep.subr.mxu0 0.0
    %115 = vmatpush1.msra.mxu0 0.0
    %116 = vmatprep.subr.mxu0 0.0
    %117 = vmatpush1.msra.mxu0 0.0
    %118 = vmatprep.subr.mxu0 0.0
    %119 = vmatpush1.msra.mxu0 0.0
    %120 = vmatprep.subr.mxu0 0.0
    %121 = vmatpush1.msra.mxu0 0.0
    %122 = vmatprep.subr.mxu0 0.0
    %123 = vmatpush1.msra.mxu0 0.0
    %124 = vmatprep.subr.mxu0 0.0
    %125 = vmatpush1.msra.mxu0 0.0
    %126 = vmatprep.subr.mxu0 0.0
    %127 = vmatpush1.msra.mxu0 0.0
    %128 = vmatprep.subr.mxu0 0.0
    %129 = vmatpush1.msra.mxu0 0.0
    %130 = vmatprep.mubr.f32.mxu0 0.0
    %131 = vmatmul.mubr.f32.gmra.mrb[0].mxu0 %v64
    %v132 = vpop.f32.mrb[0].mxu0
    %v133 = vadd.f32 %v55, %v132
    %v134 = vpop.f32.mrb[0].mxu0
    %v135 = vadd.f32 %v59, %v134
    %136 = vdwg.mxu0
    %137 = vst [vmem:[#allocation7] sm:$0xff] %v133
    %138 = vst [vmem:[#allocation7 + $0x8] sm:$0xff] %v135
    // Predicated region
    $region22: #{tpu_custom_call.1} parent=1 // pred_check
      _
    $region23: #{tpu_custom_call.1} parent=1 // pred_check_branch
      %140 = sbr.rel (0) target = $region25
    $region24: #{tpu_custom_call.1} parent=1 // pred_region
      %s142 = ssub.s32 256, 256
      %143 = vsyncadd [#allocation4], %s142
      %s145 = sshll.u32 [#allocation7], 4
      %s146 = int_to_ptr.vmem [resolvable:$true] %s145
      %148 = dma.vmem_to_hbm [thread:$0]  %s146, 256, %s3, [#allocation4]
    $region25: #{tpu_custom_call.1} parent=1 // pred_fallthru
      _
    // Predicated region
    $region26: #{tpu_custom_call.1} parent=1 // pred_check
      _
    $region27: #{tpu_custom_call.1} parent=1 // pred_check_branch
      %150 = sbr.rel (0) target = $region29
    $region28: #{tpu_custom_call.1} parent=1 // pred_region
      %151 = dma.done [#allocation4], 256
    $region29: #{tpu_custom_call.1} parent=1 // pred_fallthru
      _
    %152 = vsyncpa [#allocation3], 1
    %153 = vsyncpa [#allocation6], 1
    %154 = vsyncpa [#allocation4], 1

</llo_original>
